<compile_context>
chip_gen: v7x
topology: tpu7x:2x2x1
jax: 0.10.0
libtpu: 0.0.40
codegen_flags: <defaults>
</compile_context>

<pallas_src>
import functools

import jax
import jax.numpy as jnp
from jax.experimental import pallas as pl
from jax.experimental.pallas import tpu as pltpu


# ------------------------------ helpers ----------------------------------- #

def _round_up(x, m):
    return (x + m - 1) // m * m


def _pick_tile_m(m, k_pad, h_pad):
    """Pick an M tile that keeps double-buffered VMEM usage under budget.

    Budget is sized for the smallest-VMEM generation (v7x: 64 MiB physical,
    32 MiB scoped default); weights/bias count twice (pipeline buffers), and
    the x / h / out row tiles are double-buffered per grid step.
    """
    budget = 40 << 20
    fixed = 2 * (k_pad * 3 * h_pad * 2      # Wx (bf16)
                 + h_pad * 3 * h_pad * 2    # Wh (bf16)
                 + 3 * h_pad * 4)           # bias (f32)
    per_row = 2 * (k_pad * 2                # x tile (bf16)
                   + h_pad * 4              # h tile (f32)
                   + h_pad * 4)             # out tile (f32)
    avail = budget - fixed
    tile = avail // per_row if avail > per_row * 8 else 8
    tile = int(max(8, min(tile, 1024)))
    tile = (tile // 8) * 8                  # sublane-aligned
    return min(tile, _round_up(m, 8))


# ------------------------------ Pallas kernel ------------------------------ #

def _gru_cell_kernel(x_ref, h_ref, wx_ref, wh_ref, b_ref, o_ref, *,
                     h_pad, update_bias):
    # x_ref : (TM, K_pad)      bf16  inputs tile (zero-padded on K)
    # h_ref : (TM, H_pad)      f32   previous state tile (zero-padded on H)
    # wx_ref: (K_pad, 3*H_pad) bf16  gate-block-padded input weights
    # wh_ref: (H_pad, 3*H_pad) bf16  gate-block-padded recurrent weights
    # b_ref : (1, 3*H_pad)     f32   gate-block-padded bias
    # o_ref : (TM, H_pad)      f32   new state tile
    h = h_ref[...]
    parts = jnp.dot(x_ref[...], wx_ref[...],
                    preferred_element_type=jnp.float32)
    parts = parts + jnp.dot(h.astype(wh_ref.dtype), wh_ref[...],
                            preferred_element_type=jnp.float32)
    parts = parts + b_ref[...]

    # Gate blocks are h_pad wide (h_pad % 128 == 0) -> lane-aligned slices.
    reset = parts[:, 0 * h_pad:1 * h_pad]
    cand = parts[:, 1 * h_pad:2 * h_pad]
    update = parts[:, 2 * h_pad:3 * h_pad]

    reset = jax.nn.sigmoid(reset)
    cand = jnp.tanh(reset * cand)
    update = jax.nn.sigmoid(update + update_bias)
    o_ref[...] = (update * cand + (1.0 - update) * h).astype(o_ref.dtype)


def gru_cell_pallas(x, state, wx_pad, wh_pad, b_pad, *, size, update_bias):
    """Fused GRU cell step: one pallas_call, grid over rows (batch)."""
    m, k = x.shape
    k_pad = wx_pad.shape[0]
    h_pad = wh_pad.shape[0]
    tile_m = _pick_tile_m(m, k_pad, h_pad)
    m_pad = _round_up(max(m, tile_m), tile_m)

    # Zero-padding rows and lanes is exact (zeros contribute nothing to the
    # matmul; padded output rows/lanes are sliced off below).
    x_p = jnp.zeros((m_pad, k_pad), jnp.bfloat16).at[:m, :k].set(
        x.astype(jnp.bfloat16))
    h_p = jnp.zeros((m_pad, h_pad), jnp.float32).at[:m, :size].set(
        state.astype(jnp.float32))

    kernel = functools.partial(_gru_cell_kernel, h_pad=h_pad,
                               update_bias=float(update_bias))
    out = pl.pallas_call(
        kernel,
        out_shape=jax.ShapeDtypeStruct((m_pad, h_pad), jnp.float32),
        grid=(m_pad // tile_m,),
        in_specs=[
            pl.BlockSpec((tile_m, k_pad), lambda i: (i, 0)),     # x tile
            pl.BlockSpec((tile_m, h_pad), lambda i: (i, 0)),     # h tile
            pl.BlockSpec((k_pad, 3 * h_pad), lambda i: (0, 0)),  # Wx (bcast)
            pl.BlockSpec((h_pad, 3 * h_pad), lambda i: (0, 0)),  # Wh (bcast)
            pl.BlockSpec((1, 3 * h_pad), lambda i: (0, 0)),      # b  (bcast)
        ],
        out_specs=pl.BlockSpec((tile_m, h_pad), lambda i: (i, 0)),
        compiler_params=pltpu.CompilerParams(
            dimension_semantics=("parallel",),
            vmem_limit_bytes=48 << 20,
        ),
    )(x_p, h_p, wx_pad, wh_pad, b_pad)
    return out[:m, :size]


# --------------------------------- GRUCell --------------------------------- #

class GRUCell:
    """JAX/Pallas port of dreamerv2_torch GRUCell (act='Tanh', norm=False)."""

    def __init__(self, size, norm=False, act='Tanh', update_bias=-1, key=None):
        assert act == 'Tanh', "only the default act='Tanh' is implemented"
        # TODO(synk): norm=True (LayerNorm over `parts`) not implemented; the
        # default config uses norm=False which is an identity.
        assert not norm, "norm=True (LayerNorm) not implemented"
        self._size = size
        self._update_bias = update_bias
        self._key = jax.random.PRNGKey(1) if key is None else key
        self._params = None  # lazily created on first call (mirrors self.get)

    @property
    def state_size(self):
        return self._size

    def _build(self, in_dim):
        size = self._size
        k1, k2 = jax.random.split(self._key)
        fan_in = in_dim + size
        scale = 1.0 / float(fan_in) ** 0.5
        # Synthetic deterministic params (not a checkpoint load); stored in the
        # math layout y = cat([x, h]) @ w + b, equivalent to nn.Linear.
        w = scale * jax.random.normal(k1, (fan_in, 3 * size), jnp.float32)
        b = scale * jax.random.normal(k2, (3 * size,), jnp.float32)

        # One-time padding to MXU/lane friendly shapes:
        #   K (input features) -> multiple of 128, H (state) -> multiple of 128,
        #   gates laid out as [reset | cand | update] blocks of width h_pad.
        k_pad = _round_up(max(in_dim, 128), 128)
        h_pad = _round_up(max(size, 128), 128)
        wx, wh = w[:in_dim], w[in_dim:]
        wx_p = jnp.zeros((k_pad, 3 * h_pad), jnp.float32)
        wh_p = jnp.zeros((h_pad, 3 * h_pad), jnp.float32)
        b_p = jnp.zeros((1, 3 * h_pad), jnp.float32)
        for g in range(3):
            wx_p = wx_p.at[:in_dim, g * h_pad:g * h_pad + size].set(
                wx[:, g * size:(g + 1) * size])
            wh_p = wh_p.at[:size, g * h_pad:g * h_pad + size].set(
                wh[:, g * size:(g + 1) * size])
            b_p = b_p.at[0, g * h_pad:g * h_pad + size].set(
                b[g * size:(g + 1) * size])
        self._params = dict(
            w=w, b=b,                              # reference (torch) layout
            wx=wx_p.astype(jnp.bfloat16),          # padded bf16 MXU operands
            wh=wh_p.astype(jnp.bfloat16),
            bp=b_p,                                # padded f32 bias
            in_dim=in_dim,
        )

    def __call__(self, inputs, state):
        in_dim = inputs.shape[-1]
        if self._params is None:
            self._build(in_dim)
        assert self._params['in_dim'] == in_dim
        batch_shape = inputs.shape[:-1]
        x = inputs.reshape(-1, in_dim).astype(jnp.float32)
        h = state.reshape(-1, self._size).astype(jnp.float32)
        out = gru_cell_pallas(x, h, self._params['wx'], self._params['wh'],
                              self._params['bp'], size=self._size,
                              update_bias=self._update_bias)
        return out.reshape(batch_shape + (self._size,))


# ------------------------------ pure-JAX ref ------------------------------- #

def gru_cell_reference(inputs, state, w, b, update_bias):
    parts = jnp.concatenate([inputs, state], -1) @ w + b
    reset, cand, update = jnp.split(parts, 3, -1)
    reset = jax.nn.sigmoid(reset)
    cand = jnp.tanh(reset * cand)
    update = jax.nn.sigmoid(update + update_bias)
    return update * cand + (1.0 - update) * state


# ---------------------------------- main ----------------------------------- #

if __name__ == "__main__":
    size = 32      # hidden / state size
    in_dim = 24    # input feature size
    batch = 16

    cell = GRUCell(size, norm=False, act='Tanh', update_bias=-1,
                   key=jax.random.PRNGKey(1))

    key = jax.random.PRNGKey(0)
    k_x, k_h = jax.random.split(key)
    inputs = jax.random.normal(k_x, (batch, in_dim), jnp.float32)
    state = jax.random.normal(k_h, (batch, size), jnp.float32)

    out = cell(inputs, state)
    out = jax.block_until_ready(out)

    assert out.shape == (batch, size), out.shape
    assert out.dtype == jnp.float32
    assert bool(jnp.all(jnp.isfinite(out)))

    # Correctness vs f32 reference (loose tol accounts for bf16 matmul inputs).
    ref = gru_cell_reference(inputs, state, cell._params['w'],
                             cell._params['b'], cell._update_bias)
    err = float(jnp.max(jnp.abs(out - ref)))
    assert err < 1e-1, err

    print("KERNEL_OK")
</pallas_src>

<mosaic_0001>
module attributes {stable_mosaic.version = 11 : i64} {
  func.func @_gru_cell_kernel(%arg0: i32, %arg1: memref<16x128xbf16, #tpu.memory_space<vmem>>, %arg2: memref<16x128xf32, #tpu.memory_space<vmem>>, %arg3: memref<128x384xbf16, #tpu.memory_space<vmem>>, %arg4: memref<128x384xbf16, #tpu.memory_space<vmem>>, %arg5: memref<1x384xf32, #tpu.memory_space<vmem>>, %arg6: memref<16x128xf32, #tpu.memory_space<vmem>>) attributes {dimension_semantics = [#tpu.dimension_semantics<parallel>], iteration_bounds = array<i64: 1>, scalar_prefetch = 0 : i64, scratch_operands = 0 : i64, tpu.core_type = #tpu.core_type<tc>, window_params = [{transform_indices = @transform_0, window_bounds = array<i64: 16, 128>}, {transform_indices = @transform_1, window_bounds = array<i64: 16, 128>}, {pipeline_mode = #tpu.pipeline_mode<synchronous>, transform_indices = @transform_2, window_bounds = array<i64: 128, 384>}, {pipeline_mode = #tpu.pipeline_mode<synchronous>, transform_indices = @transform_3, window_bounds = array<i64: 128, 384>}, {pipeline_mode = #tpu.pipeline_mode<synchronous>, transform_indices = @transform_4, window_bounds = array<i64: 1, 384>}, {transform_indices = @transform_5, window_bounds = array<i64: 16, 128>}]} {
    %c0 = arith.constant 0 : index
    %c0_0 = arith.constant 0 : index
    %0 = vector.load %arg2[%c0, %c0_0] : memref<16x128xf32, #tpu.memory_space<vmem>>, vector<16x128xf32>
    %c0_1 = arith.constant 0 : index
    %c0_2 = arith.constant 0 : index
    %1 = vector.load %arg1[%c0_1, %c0_2] : memref<16x128xbf16, #tpu.memory_space<vmem>>, vector<16x128xbf16>
    %c0_3 = arith.constant 0 : index
    %c0_4 = arith.constant 0 : index
    %2 = vector.load %arg3[%c0_3, %c0_4] : memref<128x384xbf16, #tpu.memory_space<vmem>>, vector<128x384xbf16>
    %cst = arith.constant dense<0.000000e+00> : vector<16x384xf32>
    %3 = tpu.matmul %1, %2, %cst {dimension_numbers = #tpu.dot_dimension_numbers<[1], [0], [0], [1], [0, 0, 1, 1], [], []>} : vector<16x128xbf16>, vector<128x384xbf16>, vector<16x384xf32> -> vector<16x384xf32>
    %4 = arith.truncf %0 : vector<16x128xf32> to vector<16x128xbf16>
    %c0_5 = arith.constant 0 : index
    %c0_6 = arith.constant 0 : index
    %5 = vector.load %arg4[%c0_5, %c0_6] : memref<128x384xbf16, #tpu.memory_space<vmem>>, vector<128x384xbf16>
    %cst_7 = arith.constant dense<0.000000e+00> : vector<16x384xf32>
    %6 = tpu.matmul %4, %5, %cst_7 {dimension_numbers = #tpu.dot_dimension_numbers<[1], [0], [0], [1], [0, 0, 1, 1], [], []>} : vector<16x128xbf16>, vector<128x384xbf16>, vector<16x384xf32> -> vector<16x384xf32>
    %7 = arith.addf %3, %6 : vector<16x384xf32>
    %c0_8 = arith.constant 0 : index
    %c0_9 = arith.constant 0 : index
    %8 = vector.load %arg5[%c0_8, %c0_9] : memref<1x384xf32, #tpu.memory_space<vmem>>, vector<1x384xf32>
    %9 = vector.broadcast %8 : vector<1x384xf32> to vector<16x384xf32>
    %10 = arith.addf %7, %9 : vector<16x384xf32>
    %11 = vector.extract_strided_slice %10 {offsets = [0, 0], sizes = [16, 128], strides = [1, 1]} : vector<16x384xf32> to vector<16x128xf32>
    %12 = vector.extract_strided_slice %10 {offsets = [0, 128], sizes = [16, 128], strides = [1, 1]} : vector<16x384xf32> to vector<16x128xf32>
    %13 = vector.extract_strided_slice %10 {offsets = [0, 256], sizes = [16, 128], strides = [1, 1]} : vector<16x384xf32> to vector<16x128xf32>
    %14 = arith.negf %11 : vector<16x128xf32>
    %15 = math.exp %14 : vector<16x128xf32>
    %cst_10 = arith.constant 1.000000e+00 : f32
    %16 = vector.broadcast %cst_10 : f32 to vector<16x128xf32>
    %17 = arith.addf %16, %15 : vector<16x128xf32>
    %18 = arith.divf %16, %17 : vector<16x128xf32>
    %19 = arith.mulf %18, %12 : vector<16x128xf32>
    %20 = math.tanh %19 : vector<16x128xf32>
    %cst_11 = arith.constant -1.000000e+00 : f32
    %21 = vector.broadcast %cst_11 : f32 to vector<16x128xf32>
    %22 = arith.addf %13, %21 : vector<16x128xf32>
    %23 = arith.negf %22 : vector<16x128xf32>
    %24 = math.exp %23 : vector<16x128xf32>
    %cst_12 = arith.constant 1.000000e+00 : f32
    %25 = vector.broadcast %cst_12 : f32 to vector<16x128xf32>
    %26 = arith.addf %25, %24 : vector<16x128xf32>
    %27 = arith.divf %25, %26 : vector<16x128xf32>
    %28 = arith.mulf %27, %20 : vector<16x128xf32>
    %cst_13 = arith.constant 1.000000e+00 : f32
    %29 = vector.broadcast %cst_13 : f32 to vector<16x128xf32>
    %30 = arith.subf %29, %27 : vector<16x128xf32>
    %31 = arith.mulf %30, %0 : vector<16x128xf32>
    %32 = arith.addf %28, %31 : vector<16x128xf32>
    %c0_14 = arith.constant 0 : index
    %c0_15 = arith.constant 0 : index
    %33 = vector.load %arg6[%c0_14, %c0_15] : memref<16x128xf32, #tpu.memory_space<vmem>>, vector<16x128xf32>
    tpu.vector_store %arg6[%c0_14, %c0_15], %32 {strides = array<i32>} : memref<16x128xf32, #tpu.memory_space<vmem>>, vector<16x128xf32>,
    return
  }
  func.func @transform_0(%arg0: i32) -> (i32, i32) {
    %c0_i32 = arith.constant 0 : i32
    %c0_i32_0 = arith.constant 0 : i32
    return %arg0, %c0_i32 : i32, i32
  }
  func.func @transform_1(%arg0: i32) -> (i32, i32) {
    %c0_i32 = arith.constant 0 : i32
    %c0_i32_0 = arith.constant 0 : i32
    return %arg0, %c0_i32 : i32, i32
  }
  func.func @transform_2(%arg0: i32) -> (i32, i32) {
    %c0_i32 = arith.constant 0 : i32
    %c0_i32_0 = arith.constant 0 : i32
    %c0_i32_1 = arith.constant 0 : i32
    return %c0_i32, %c0_i32_0 : i32, i32
  }
  func.func @transform_3(%arg0: i32) -> (i32, i32) {
    %c0_i32 = arith.constant 0 : i32
    %c0_i32_0 = arith.constant 0 : i32
    %c0_i32_1 = arith.constant 0 : i32
    return %c0_i32, %c0_i32_0 : i32, i32
  }
  func.func @transform_4(%arg0: i32) -> (i32, i32) {
    %c0_i32 = arith.constant 0 : i32
    %c0_i32_0 = arith.constant 0 : i32
    %c0_i32_1 = arith.constant 0 : i32
    return %c0_i32, %c0_i32_0 : i32, i32
  }
  func.func @transform_5(%arg0: i32) -> (i32, i32) {
    %c0_i32 = arith.constant 0 : i32
    %c0_i32_0 = arith.constant 0 : i32
    return %arg0, %c0_i32 : i32, i32
  }
}

</mosaic_0001>

<llo_original>
// kernel: tpu_custom_call.1
$region0: #{tpu_custom_call.1}
  #allocation0 [shape = 'u32[]', space=smem, size = 0x4, offset = 0x4, fixed_abs, tag = 'smem constant byte address 0x4 - core index']
  #allocation1 [shape = 'u32[144,128]{1,0:T(1,128)}', space=vmem, size = 0x12000, scoped, tag = 'internal scratch']
  %s0 = inlined_call_operand.hbm [shape: bf16[16,128], index: 0, kind: input, shape index: {}]
  %s1 = inlined_call_operand.hbm [shape: f32[16,128], index: 1, kind: input, shape index: {}]
  %s2 = inlined_call_operand.hbm [shape: bf16[128,384], index: 2, kind: input, shape index: {}]
  %s3 = inlined_call_operand.hbm [shape: bf16[128,384], index: 3, kind: input, shape index: {}]
  %s4 = inlined_call_operand.vmem [shape: f32[1,384], index: 4, kind: input, shape index: {}]
  %s5 = inlined_call_operand.hbm [shape: f32[16,128], index: 5, kind: output, shape index: {}]
  %s6 = sld [smem:[#allocation0]]
  $region46: #{tpu_custom_call.1} parent=0
    _
  %s8 = ssub.s32 1, %s6
  %s9 = scalar_select 0, %s8, %s6
  $region1: #{tpu_custom_call.1} parent=0
    #allocation2 [shape = 'u8[4096]{0}', space=vmem, size = 0x1000, scoped, tag = 'input window, operand 0, single buffered']
    #allocation3 [shape = 's32[1]{0}', space=sflag, size = 0x4, scoped, tag = 'scoped memory for tpu_custom_call.1']
    #allocation4 [shape = 's32[1]{0}', space=sflag, size = 0x4, scoped, tag = 'scoped memory for tpu_custom_call.1']
    #allocation5 [shape = 'u8[8192]{0}', space=vmem, size = 0x2000, scoped, tag = 'input window, operand 1, single buffered']
    #allocation6 [shape = 's32[1]{0}', space=sflag, size = 0x4, scoped, tag = 'scoped memory for tpu_custom_call.1']
    #allocation7 [shape = 'u8[98304]{0}', space=vmem, size = 0x18000, scoped, tag = 'input window, operand 2, single buffered']
    #allocation8 [shape = 'u8[98304]{0}', space=vmem, size = 0x18000, scoped, tag = 'input window, operand 3, single buffered']
    #allocation9 [shape = 's32[1]{0}', space=sflag, size = 0x4, scoped, tag = 'scoped memory for tpu_custom_call.1']
    #allocation10 [shape = 'u8[8192]{0}', space=vmem, size = 0x2000, scoped, tag = 'output window, operand 0, single buffered']
    %10 = vsyncpa [#allocation3], 0
    %11 = vsyncpa [#allocation6], 0
    %12 = vsyncpa [#allocation9], 0
    %13 = vsyncpa [#allocation4], 0
    // Predicated region
    $region2: #{tpu_custom_call.1} parent=1 // pred_check
      _
    $region3: #{tpu_custom_call.1} parent=1 // pred_check_branch
      %15 = sbr.rel (0) target = $region5
    $region4: #{tpu_custom_call.1} parent=1 // pred_region
      %s17 = ssub.s32 128, 128
      %18 = vsyncadd [#allocation3], %s17
      %s19 = sshll.u32 [#allocation2], 4
      %s20 = int_to_ptr.vmem [resolvable:$true] %s19
      %25 = dma.hbm_to_vmem [thread:$0]  %s0, 128, %s20, [#allocation3], 64, 64, 4
    $region5: #{tpu_custom_call.1} parent=1 // pred_fallthru
      _
    // Predicated region
    $region6: #{tpu_custom_call.1} parent=1 // pred_check
      _
    $region7: #{tpu_custom_call.1} parent=1 // pred_check_branch
      %27 = sbr.rel (0) target = $region9
    $region8: #{tpu_custom_call.1} parent=1 // pred_region
      %s29 = ssub.s32 256, 256
      %30 = vsyncadd [#allocation6], %s29
      %s31 = sshll.u32 [#allocation5], 4
      %s32 = int_to_ptr.vmem [resolvable:$true] %s31
      %37 = dma.hbm_to_vmem [thread:$0]  %s1, 256, %s32, [#allocation6], 128, 128, 8
    $region9: #{tpu_custom_call.1} parent=1 // pred_fallthru
      _
    // Predicated region
    $region10: #{tpu_custom_call.1} parent=1 // pred_check
      _
    $region11: #{tpu_custom_call.1} parent=1 // pred_check_branch
      %39 = sbr.rel (0) target = $region13
    $region12: #{tpu_custom_call.1} parent=1 // pred_region
      %s41 = ssub.s32 3072, 3072
      %42 = vsyncadd [#allocation6], %s41
      %s43 = sshll.u32 [#allocation7], 4
      %s44 = int_to_ptr.vmem [resolvable:$true] %s43
      %49 = dma.hbm_to_vmem [thread:$0]  %s2, 3072, %s44, [#allocation6], 192, 192, 12
    $region13: #{tpu_custom_call.1} parent=1 // pred_fallthru
      _
    // Predicated region
    $region14: #{tpu_custom_call.1} parent=1 // pred_check
      _
    $region15: #{tpu_custom_call.1} parent=1 // pred_check_branch
      %51 = sbr.rel (0) target = $region17
    $region16: #{tpu_custom_call.1} parent=1 // pred_region
      %s53 = ssub.s32 3072, 3072
      %54 = vsyncadd [#allocation9], %s53
      %s55 = sshll.u32 [#allocation8], 4
      %s56 = int_to_ptr.vmem [resolvable:$true] %s55
      %61 = dma.hbm_to_vmem [thread:$0]  %s3, 3072, %s56, [#allocation9], 192, 192, 12
    $region17: #{tpu_custom_call.1} parent=1 // pred_fallthru
      _
    // Predicated region
    $region18: #{tpu_custom_call.1} parent=1 // pred_check
      _
    $region19: #{tpu_custom_call.1} parent=1 // pred_check_branch
      %63 = sbr.rel (0) target = $region21
    $region20: #{tpu_custom_call.1} parent=1 // pred_region
      _
    $region21: #{tpu_custom_call.1} parent=1 // pred_fallthru
      _
    // Predicated region
    $region22: #{tpu_custom_call.1} parent=1 // pred_check
      _
    $region23: #{tpu_custom_call.1} parent=1 // pred_check_branch
      %65 = sbr.rel (0) target = $region25
    $region24: #{tpu_custom_call.1} parent=1 // pred_region
      %66 = dma.done [#allocation3], 128
    $region25: #{tpu_custom_call.1} parent=1 // pred_fallthru
      _
    // Predicated region
    $region26: #{tpu_custom_call.1} parent=1 // pred_check
      _
    $region27: #{tpu_custom_call.1} parent=1 // pred_check_branch
      %68 = sbr.rel (0) target = $region29
    $region28: #{tpu_custom_call.1} parent=1 // pred_region
      %69 = dma.done [#allocation6], 256
    $region29: #{tpu_custom_call.1} parent=1 // pred_fallthru
      _
    // Predicated region
    $region30: #{tpu_custom_call.1} parent=1 // pred_check
      _
    $region31: #{tpu_custom_call.1} parent=1 // pred_check_branch
      %71 = sbr.rel (0) target = $region33
    $region32: #{tpu_custom_call.1} parent=1 // pred_region
      %72 = dma.done [#allocation6], 3072
    $region33: #{tpu_custom_call.1} parent=1 // pred_fallthru
      _
    // Predicated region
    $region34: #{tpu_custom_call.1} parent=1 // pred_check
      _
    $region35: #{tpu_custom_call.1} parent=1 // pred_check_branch
      %74 = sbr.rel (0) target = $region37
    $region36: #{tpu_custom_call.1} parent=1 // pred_region
      %75 = dma.done [#allocation9], 3072
    $region37: #{tpu_custom_call.1} parent=1 // pred_fallthru
      _
    %v77 = vld [vmem:[#allocation5] sm:$0xff]
    %v78 = vld [vmem:[#allocation5 + $0x8] sm:$0xff]
    %v79 = vld [vmem:[#allocation2] sm:$0xf]
    %v80 = vld [vmem:[#allocation2 + $0x4] sm:$0xf]
    %v81 = vld [vmem:[#allocation7] sm:$0xff]
    %v82 = vld [vmem:[#allocation7 + $0x8] sm:$0xf]
    %v83 = vld [vmem:[#allocation7 + $0xc] sm:$0xff]
    %v84 = vld [vmem:[#allocation7 + $0x14] sm:$0xf]
    %v85 = vld [vmem:[#allocation7 + $0x18] sm:$0xff]
    %v86 = vld [vmem:[#allocation7 + $0x20] sm:$0xf]
    %v87 = vld [vmem:[#allocation7 + $0x24] sm:$0xff]
    %v88 = vld [vmem:[#allocation7 + $0x2c] sm:$0xf]
    %v89 = vld [vmem:[#allocation7 + $0x30] sm:$0xff]
    %v90 = vld [vmem:[#allocation7 + $0x38] sm:$0xf]
    %v91 = vld [vmem:[#allocation7 + $0x3c] sm:$0xff]
    %v92 = vld [vmem:[#allocation7 + $0x44] sm:$0xf]
    %v93 = vld [vmem:[#allocation7 + $0x48] sm:$0xff]
    %v94 = vld [vmem:[#allocation7 + $0x50] sm:$0xf]
    %v95 = vld [vmem:[#allocation7 + $0x54] sm:$0xff]
    %v96 = vld [vmem:[#allocation7 + $0x5c] sm:$0xf]
    %v97 = vld [vmem:[#allocation7 + $0x60] sm:$0xff]
    %v98 = vld [vmem:[#allocation7 + $0x68] sm:$0xf]
    %v99 = vld [vmem:[#allocation7 + $0x6c] sm:$0xff]
    %v100 = vld [vmem:[#allocation7 + $0x74] sm:$0xf]
    %v101 = vld [vmem:[#allocation7 + $0x78] sm:$0xff]
    %v102 = vld [vmem:[#allocation7 + $0x80] sm:$0xf]
    %v103 = vld [vmem:[#allocation7 + $0x84] sm:$0xff]
    %v104 = vld [vmem:[#allocation7 + $0x8c] sm:$0xf]
    %v105 = vld [vmem:[#allocation7 + $0x90] sm:$0xff]
    %v106 = vld [vmem:[#allocation7 + $0x98] sm:$0xf]
    %v107 = vld [vmem:[#allocation7 + $0x9c] sm:$0xff]
    %v108 = vld [vmem:[#allocation7 + $0xa4] sm:$0xf]
    %v109 = vld [vmem:[#allocation7 + $0xa8] sm:$0xff]
    %v110 = vld [vmem:[#allocation7 + $0xb0] sm:$0xf]
    %v111 = vld [vmem:[#allocation7 + $0xb4] sm:$0xff]
    %v112 = vld [vmem:[#allocation7 + $0xbc] sm:$0xf]
    %v113 = vpack.c.bf16 %v78, %v77
    %v114 = vld [vmem:[#allocation8] sm:$0xff]
    %v115 = vld [vmem:[#allocation8 + $0x8] sm:$0xf]
    %v116 = vld [vmem:[#allocation8 + $0xc] sm:$0xff]
    %v117 = vld [vmem:[#allocation8 + $0x14] sm:$0xf]
    %v118 = vld [vmem:[#allocation8 + $0x18] sm:$0xff]
    %v119 = vld [vmem:[#allocation8 + $0x20] sm:$0xf]
    %v120 = vld [vmem:[#allocation8 + $0x24] sm:$0xff]
    %v121 = vld [vmem:[#allocation8 + $0x2c] sm:$0xf]
    %v122 = vld [vmem:[#allocation8 + $0x30] sm:$0xff]
    %v123 = vld [vmem:[#allocation8 + $0x38] sm:$0xf]
    %v124 = vld [vmem:[#allocation8 + $0x3c] sm:$0xff]
    %v125 = vld [vmem:[#allocation8 + $0x44] sm:$0xf]
    %v126 = vld [vmem:[#allocation8 + $0x48] sm:$0xff]
    %v127 = vld [vmem:[#allocation8 + $0x50] sm:$0xf]
    %v128 = vld [vmem:[#allocation8 + $0x54] sm:$0xff]
    %v129 = vld [vmem:[#allocation8 + $0x5c] sm:$0xf]
    %v130 = vld [vmem:[#allocation8 + $0x60] sm:$0xff]
    %v131 = vld [vmem:[#allocation8 + $0x68] sm:$0xf]
    %v132 = vld [vmem:[#allocation8 + $0x6c] sm:$0xff]
    %v133 = vld [vmem:[#allocation8 + $0x74] sm:$0xf]
    %v134 = vld [vmem:[#allocation8 + $0x78] sm:$0xff]
    %v135 = vld [vmem:[#allocation8 + $0x80] sm:$0xf]
    %v136 = vld [vmem:[#allocation8 + $0x84] sm:$0xff]
    %v137 = vld [vmem:[#allocation8 + $0x8c] sm:$0xf]
    %v138 = vld [vmem:[#allocation8 + $0x90] sm:$0xff]
    %v139 = vld [vmem:[#allocation8 + $0x98] sm:$0xf]
    %v140 = vld [vmem:[#allocation8 + $0x9c] sm:$0xff]
    %v141 = vld [vmem:[#allocation8 + $0xa4] sm:$0xf]
    %v142 = vld [vmem:[#allocation8 + $0xa8] sm:$0xff]
    %v143 = vld [vmem:[#allocation8 + $0xb0] sm:$0xf]
    %v144 = vld [vmem:[#allocation8 + $0xb4] sm:$0xff]
    %v145 = vld [vmem:[#allocation8 + $0xbc] sm:$0xf]
    %v178 = vunpack.c.l.b16 %v114
    %v179 = vunpack.c.h.b16 %v114
    %v180 = vunpack.c.l.b16 %v115
    %v181 = vunpack.c.l.b16 %v116
    %v182 = vunpack.c.h.b16 %v116
    %v183 = vunpack.c.l.b16 %v117
    %v184 = vunpack.c.l.b16 %v118
    %v185 = vunpack.c.h.b16 %v118
    %v186 = vunpack.c.l.b16 %v119
    %v187 = vunpack.c.l.b16 %v120
    %v188 = vunpack.c.h.b16 %v120
    %v189 = vunpack.c.l.b16 %v121
    %v190 = vunpack.c.l.b16 %v122
    %v191 = vunpack.c.h.b16 %v122
    %v192 = vunpack.c.l.b16 %v123
    %v193 = vunpack.c.l.b16 %v124
    %v194 = vunpack.c.h.b16 %v124
    %v195 = vunpack.c.l.b16 %v125
    %v196 = vunpack.c.l.b16 %v126
    %v197 = vunpack.c.h.b16 %v126
    %v198 = vunpack.c.l.b16 %v127
    %v199 = vunpack.c.l.b16 %v128
    %v200 = vunpack.c.h.b16 %v128
    %v201 = vunpack.c.l.b16 %v129
    %v202 = vunpack.c.l.b16 %v130
    %v203 = vunpack.c.h.b16 %v130
    %v204 = vunpack.c.l.b16 %v131
    %v205 = vunpack.c.l.b16 %v132
    %v206 = vunpack.c.h.b16 %v132
    %v207 = vunpack.c.l.b16 %v133
    %v208 = vunpack.c.l.b16 %v134
    %v209 = vunpack.c.h.b16 %v134
    %v210 = vunpack.c.l.b16 %v135
    %v211 = vunpack.c.l.b16 %v136
    %v212 = vunpack.c.h.b16 %v136
    %v213 = vunpack.c.l.b16 %v137
    %v214 = vunpack.c.l.b16 %v138
    %v215 = vunpack.c.h.b16 %v138
    %v216 = vunpack.c.l.b16 %v139
    %v217 = vunpack.c.l.b16 %v140
    %v218 = vunpack.c.h.b16 %v140
    %v219 = vunpack.c.l.b16 %v141
    %v220 = vunpack.c.l.b16 %v142
    %v221 = vunpack.c.h.b16 %v142
    %v222 = vunpack.c.l.b16 %v143
    %v223 = vunpack.c.l.b16 %v144
    %v224 = vunpack.c.h.b16 %v144
    %v225 = vunpack.c.l.b16 %v145
    %v226 = vpack.c.b16 %v181, %v178
    %v227 = vpack.c.b16 %v182, %v179
    %v228 = vpack.c.b16 %v183, %v180
    %v229 = vpack.c.b16 %v187, %v184
    %v230 = vpack.c.b16 %v188, %v185
    %v231 = vpack.c.b16 %v189, %v186
    %v232 = vpack.c.b16 %v193, %v190
    %v233 = vpack.c.b16 %v194, %v191
    %v234 = vpack.c.b16 %v195, %v192
    %v235 = vpack.c.b16 %v199, %v196
    %v236 = vpack.c.b16 %v200, %v197
    %v237 = vpack.c.b16 %v201, %v198
    %v238 = vpack.c.b16 %v205, %v202
    %v239 = vpack.c.b16 %v206, %v203
    %v240 = vpack.c.b16 %v207, %v204
    %v241 = vpack.c.b16 %v211, %v208
    %v242 = vpack.c.b16 %v212, %v209
    %v243 = vpack.c.b16 %v213, %v210
    %v244 = vpack.c.b16 %v217, %v214
    %v245 = vpack.c.b16 %v218, %v215
    %v246 = vpack.c.b16 %v219, %v216
    %v247 = vpack.c.b16 %v223, %v220
    %v248 = vpack.c.b16 %v224, %v221
    %v249 = vpack.c.b16 %v225, %v222
    %274 = vmatprep.subr.bf16.mxu0 %v227
    %275 = vmatpush1.bf16.msra.mxu0 %v226
    %276 = vmatprep.subr.bf16.mxu0 %v230
    %277 = vmatpush1.bf16.msra.mxu0 %v229
    %278 = vmatprep.subr.bf16.mxu0 %v233
    %279 = vmatpush1.bf16.msra.mxu0 %v232
    %280 = vmatprep.subr.bf16.mxu0 %v236
    %281 = vmatpush1.bf16.msra.mxu0 %v235
    %282 = vmatprep.subr.bf16.mxu0 %v239
    %283 = vmatpush1.bf16.msra.mxu0 %v238
    %284 = vmatprep.subr.bf16.mxu0 %v242
    %285 = vmatpush1.bf16.msra.mxu0 %v241
    %286 = vmatprep.subr.bf16.mxu0 %v245
    %287 = vmatpush1.bf16.msra.mxu0 %v244
    %288 = vmatprep.subr.bf16.mxu0 %v248
    %289 = vmatpush1.bf16.msra.mxu0 %v247
    %290 = vmatprep.subr.bf16.mxu0 0
    %291 = vmatpush1.bf16.msra.mxu0 0
    %292 = vmatprep.subr.bf16.mxu0 0
    %293 = vmatpush1.bf16.msra.mxu0 0
    %294 = vmatprep.subr.bf16.mxu0 0
    %295 = vmatpush1.bf16.msra.mxu0 0
    %296 = vmatprep.subr.bf16.mxu0 0
    %297 = vmatpush1.bf16.msra.mxu0 0
    %298 = vmatprep.subr.bf16.mxu0 0
    %299 = vmatpush1.bf16.msra.mxu0 0
    %300 = vmatprep.subr.bf16.mxu0 0
    %301 = vmatpush1.bf16.msra.mxu0 0
    %302 = vmatprep.subr.bf16.mxu0 0
    %303 = vmatpush1.bf16.msra.mxu0 0
    %304 = vmatprep.subr.bf16.mxu0 0
    %305 = vmatpush1.bf16.msra.mxu0 0
    %306 = vmatprep.mubr.bf16.mxu0 0
    %307 = vmatmul.mubr.bf16.gmra.mrb[0].mxu0 %v113
    %v308 = vpop.f32.mrb[0].mxu0
    %v309 = vadd.f32 0.0, %v308
    %v310 = vpop.f32.mrb[0].mxu0
    %v311 = vadd.f32 0.0, %v310
    %v312 = vpop.f32.mrb[0].mxu0
    %v313 = vadd.f32 0.0, %v312
    %v314 = vpop.f32.mrb[0].mxu0
    %v315 = vadd.f32 0.0, %v314
    %316 = vdwg.mxu0
    %317 = vmatprep.subr.bf16.mxu0 0
    %318 = vmatpush1.bf16.msra.mxu0 %v228
    %319 = vmatprep.subr.bf16.mxu0 0
    %320 = vmatpush1.bf16.msra.mxu0 %v231
    %321 = vmatprep.subr.bf16.mxu0 0
    %322 = vmatpush1.bf16.msra.mxu0 %v234
    %323 = vmatprep.subr.bf16.mxu0 0
    %324 = vmatpush1.bf16.msra.mxu0 %v237
    %325 = vmatprep.subr.bf16.mxu0 0
    %326 = vmatpush1.bf16.msra.mxu0 %v240
    %327 = vmatprep.subr.bf16.mxu0 0
    %328 = vmatpush1.bf16.msra.mxu0 %v243
    %329 = vmatprep.subr.bf16.mxu0 0
    %330 = vmatpush1.bf16.msra.mxu0 %v246
    %331 = vmatprep.subr.bf16.mxu0 0
    %332 = vmatpush1.bf16.msra.mxu0 %v249
    %333 = vmatprep.subr.bf16.mxu0 0
    %334 = vmatpush1.bf16.msra.mxu0 0
    %335 = vmatprep.subr.bf16.mxu0 0
    %336 = vmatpush1.bf16.msra.mxu0 0
    %337 = vmatprep.subr.bf16.mxu0 0
    %338 = vmatpush1.bf16.msra.mxu0 0
    %339 = vmatprep.subr.bf16.mxu0 0
    %340 = vmatpush1.bf16.msra.mxu0 0
    %341 = vmatprep.subr.bf16.mxu0 0
    %342 = vmatpush1.bf16.msra.mxu0 0
    %343 = vmatprep.subr.bf16.mxu0 0
    %344 = vmatpush1.bf16.msra.mxu0 0
    %345 = vmatprep.subr.bf16.mxu0 0
    %346 = vmatpush1.bf16.msra.mxu0 0
    %347 = vmatprep.subr.bf16.mxu0 0
    %348 = vmatpush1.bf16.msra.mxu0 0
    %349 = vmatprep.mubr.bf16.mxu0 0
    %350 = vmatmul.mubr.bf16.gmra.mrb[0].mxu0 %v113
    %v351 = vpop.f32.mrb[0].mxu0
    %v352 = vadd.f32 0.0, %v351
    %v353 = vpop.f32.mrb[0].mxu0
    %v354 = vpop.f32.mrb[0].mxu0
    %v355 = vadd.f32 0.0, %v354
    %v356 = vpop.f32.mrb[0].mxu0
    %357 = vdwg.mxu0
    %v360 = vunpack.c.l.b16 %v79
    %v361 = vunpack.c.l.b16 %v80
    %v362 = vpack.c.b16 %v361, %v360
    %v396 = vunpack.c.l.b16 %v81
    %v397 = vunpack.c.h.b16 %v81
    %v398 = vunpack.c.l.b16 %v82
    %v399 = vunpack.c.l.b16 %v83
    %v400 = vunpack.c.h.b16 %v83
    %v401 = vunpack.c.l.b16 %v84
    %v402 = vunpack.c.l.b16 %v85
    %v403 = vunpack.c.h.b16 %v85
    %v404 = vunpack.c.l.b16 %v86
    %v405 = vunpack.c.l.b16 %v87
    %v406 = vunpack.c.h.b16 %v87
    %v407 = vunpack.c.l.b16 %v88
    %v408 = vunpack.c.l.b16 %v89
    %v409 = vunpack.c.h.b16 %v89
    %v410 = vunpack.c.l.b16 %v90
    %v411 = vunpack.c.l.b16 %v91
    %v412 = vunpack.c.h.b16 %v91
    %v413 = vunpack.c.l.b16 %v92
    %v414 = vunpack.c.l.b16 %v93
    %v415 = vunpack.c.h.b16 %v93
    %v416 = vunpack.c.l.b16 %v94
    %v417 = vunpack.c.l.b16 %v95
    %v418 = vunpack.c.h.b16 %v95
    %v419 = vunpack.c.l.b16 %v96
    %v420 = vunpack.c.l.b16 %v97
    %v421 = vunpack.c.h.b16 %v97
    %v422 = vunpack.c.l.b16 %v98
    %v423 = vunpack.c.l.b16 %v99
    %v424 = vunpack.c.h.b16 %v99
    %v425 = vunpack.c.l.b16 %v100
    %v426 = vunpack.c.l.b16 %v101
    %v427 = vunpack.c.h.b16 %v101
    %v428 = vunpack.c.l.b16 %v102
    %v429 = vunpack.c.l.b16 %v103
    %v430 = vunpack.c.h.b16 %v103
    %v431 = vunpack.c.l.b16 %v104
    %v432 = vunpack.c.l.b16 %v105
    %v433 = vunpack.c.h.b16 %v105
    %v434 = vunpack.c.l.b16 %v106
    %v435 = vunpack.c.l.b16 %v107
    %v436 = vunpack.c.h.b16 %v107
    %v437 = vunpack.c.l.b16 %v108
    %v438 = vunpack.c.l.b16 %v109
    %v439 = vunpack.c.h.b16 %v109
    %v440 = vunpack.c.l.b16 %v110
    %v441 = vunpack.c.l.b16 %v111
    %v442 = vunpack.c.h.b16 %v111
    %v443 = vunpack.c.l.b16 %v112
    %v444 = vpack.c.b16 %v399, %v396
    %v445 = vpack.c.b16 %v400, %v397
    %v446 = vpack.c.b16 %v401, %v398
    %v447 = vpack.c.b16 %v405, %v402
    %v448 = vpack.c.b16 %v406, %v403
    %v449 = vpack.c.b16 %v407, %v404
    %v450 = vpack.c.b16 %v411, %v408
    %v451 = vpack.c.b16 %v412, %v409
    %v452 = vpack.c.b16 %v413, %v410
    %v453 = vpack.c.b16 %v417, %v414
    %v454 = vpack.c.b16 %v418, %v415
    %v455 = vpack.c.b16 %v419, %v416
    %v456 = vpack.c.b16 %v423, %v420
    %v457 = vpack.c.b16 %v424, %v421
    %v458 = vpack.c.b16 %v425, %v422
    %v459 = vpack.c.b16 %v429, %v426
    %v460 = vpack.c.b16 %v430, %v427
    %v461 = vpack.c.b16 %v431, %v428
    %v462 = vpack.c.b16 %v435, %v432
    %v463 = vpack.c.b16 %v436, %v433
    %v464 = vpack.c.b16 %v437, %v434
    %v465 = vpack.c.b16 %v441, %v438
    %v466 = vpack.c.b16 %v442, %v439
    %v467 = vpack.c.b16 %v443, %v440
    %492 = vmatprep.subr.bf16.mxu0 %v445
    %493 = vmatpush1.bf16.msra.mxu0 %v444
    %494 = vmatprep.subr.bf16.mxu0 %v448
    %495 = vmatpush1.bf16.msra.mxu0 %v447
    %496 = vmatprep.subr.bf16.mxu0 %v451
    %497 = vmatpush1.bf16.msra.mxu0 %v450
    %498 = vmatprep.subr.bf16.mxu0 %v454
    %499 = vmatpush1.bf16.msra.mxu0 %v453
    %500 = vmatprep.subr.bf16.mxu0 %v457
    %501 = vmatpush1.bf16.msra.mxu0 %v456
    %502 = vmatprep.subr.bf16.mxu0 %v460
    %503 = vmatpush1.bf16.msra.mxu0 %v459
    %504 = vmatprep.subr.bf16.mxu0 %v463
    %505 = vmatpush1.bf16.msra.mxu0 %v462
    %506 = vmatprep.subr.bf16.mxu0 %v466
    %507 = vmatpush1.bf16.msra.mxu0 %v465
    %508 = vmatprep.subr.bf16.mxu0 0
    %509 = vmatpush1.bf16.msra.mxu0 0
    %510 = vmatprep.subr.bf16.mxu0 0
    %511 = vmatpush1.bf16.msra.mxu0 0
    %512 = vmatprep.subr.bf16.mxu0 0
    %513 = vmatpush1.bf16.msra.mxu0 0
    %514 = vmatprep.subr.bf16.mxu0 0
    %515 = vmatpush1.bf16.msra.mxu0 0
    %516 = vmatprep.subr.bf16.mxu0 0
    %517 = vmatpush1.bf16.msra.mxu0 0
    %518 = vmatprep.subr.bf16.mxu0 0
    %519 = vmatpush1.bf16.msra.mxu0 0
    %520 = vmatprep.subr.bf16.mxu0 0
    %521 = vmatpush1.bf16.msra.mxu0 0
    %522 = vmatprep.subr.bf16.mxu0 0
    %523 = vmatpush1.bf16.msra.mxu0 0
    %524 = vmatprep.mubr.bf16.mxu0 0
    %525 = vmatmul.mubr.bf16.gmra.mrb[0].mxu0 %v362
    %v526 = vpop.f32.mrb[0].mxu0
    %v527 = vadd.f32 %v309, %v526
    %v528 = vpop.f32.mrb[0].mxu0
    %v529 = vadd.f32 %v311, %v528
    %v530 = vpop.f32.mrb[0].mxu0
    %v531 = vadd.f32 %v313, %v530
    %v532 = vpop.f32.mrb[0].mxu0
    %v533 = vadd.f32 %v315, %v532
    %534 = vdwg.mxu0
    %535 = vmatprep.subr.bf16.mxu0 0
    %536 = vmatpush1.bf16.msra.mxu0 %v446
    %537 = vmatprep.subr.bf16.mxu0 0
    %538 = vmatpush1.bf16.msra.mxu0 %v449
    %539 = vmatprep.subr.bf16.mxu0 0
    %540 = vmatpush1.bf16.msra.mxu0 %v452
    %541 = vmatprep.subr.bf16.mxu0 0
    %542 = vmatpush1.bf16.msra.mxu0 %v455
    %543 = vmatprep.subr.bf16.mxu0 0
    %544 = vmatpush1.bf16.msra.mxu0 %v458
    %545 = vmatprep.subr.bf16.mxu0 0
    %546 = vmatpush1.bf16.msra.mxu0 %v461
    %547 = vmatprep.subr.bf16.mxu0 0
    %548 = vmatpush1.bf16.msra.mxu0 %v464
    %549 = vmatprep.subr.bf16.mxu0 0
    %550 = vmatpush1.bf16.msra.mxu0 %v467
    %551 = vmatprep.subr.bf16.mxu0 0
    %552 = vmatpush1.bf16.msra.mxu0 0
    %553 = vmatprep.subr.bf16.mxu0 0
    %554 = vmatpush1.bf16.msra.mxu0 0
    %555 = vmatprep.subr.bf16.mxu0 0
    %556 = vmatpush1.bf16.msra.mxu0 0
    %557 = vmatprep.subr.bf16.mxu0 0
    %558 = vmatpush1.bf16.msra.mxu0 0
    %559 = vmatprep.subr.bf16.mxu0 0
    %560 = vmatpush1.bf16.msra.mxu0 0
    %561 = vmatprep.subr.bf16.mxu0 0
    %562 = vmatpush1.bf16.msra.mxu0 0
    %563 = vmatprep.subr.bf16.mxu0 0
    %564 = vmatpush1.bf16.msra.mxu0 0
    %565 = vmatprep.subr.bf16.mxu0 0
    %566 = vmatpush1.bf16.msra.mxu0 0
    %567 = vmatprep.mubr.bf16.mxu0 0
    %568 = vmatmul.mubr.bf16.gmra.mrb[0].mxu0 %v362
    %v569 = vpop.f32.mrb[0].mxu0
    %v570 = vadd.f32 %v352, %v569
    %v571 = vpop.f32.mrb[0].mxu0
    %v572 = vpop.f32.mrb[0].mxu0
    %v573 = vadd.f32 %v355, %v572
    %v574 = vpop.f32.mrb[0].mxu0
    %575 = vdwg.mxu0
    %v576 = vld [vmem:[%s4] sm:$0x7]
    %v578 = vlaneseq
    %v579 = vshrl.u32 %v578, 7
    %v580 = vsub.s32 0, %v579
    %v581 = vrot.slane %v576, %v580
    %v582 = vlaneseq
    %v583 = vshrl.u32 %v582, 7
    %v584 = vsub.s32 1, %v583
    %v585 = vrot.slane %v576, %v584
    %v586 = vlaneseq
    %v587 = vshrl.u32 %v586, 7
    %v588 = vsub.s32 2, %v587
    %v589 = vrot.slane %v576, %v588
    %v593 = vadd.f32 %v527, %v581
    %v594 = vadd.f32 %v529, %v585
    %v595 = vadd.f32 %v570, %v589
    %v596 = vadd.f32 %v531, %v581
    %v597 = vadd.f32 %v533, %v585
    %v598 = vadd.f32 %v573, %v589
    %v599 = vxor.u32 %v593, 2147483648
    %v600 = vxor.u32 %v596, 2147483648
    %v601 = vmul.f32 %v599, 1.442695
    %v602 = vpow.pop %v601
    %v603 = vmul.f32 %v600, 1.442695
    %v604 = vpow.pop %v603
    %v605 = vadd.f32 %v602, 1.0
    %v606 = vadd.f32 %v604, 1.0
    %v607 = vrcp.pop %v605
    %v608 = vmul.f32 1.0, %v607
    %v609 = vrcp.pop %v606
    %v610 = vmul.f32 1.0, %v609
    %v611 = vmul.f32 %v608, %v594
    %v612 = vmul.f32 %v610, %v597
    %v613 = vtanh.pop %v611
    %v614 = vtanh.pop %v612
    %v615 = vadd.f32 %v595, -1.0
    %v616 = vadd.f32 %v598, -1.0
    %v617 = vxor.u32 %v615, 2147483648
    %v618 = vxor.u32 %v616, 2147483648
    %v619 = vmul.f32 %v617, 1.442695
    %v620 = vpow.pop %v619
    %v621 = vmul.f32 %v618, 1.442695
    %v622 = vpow.pop %v621
    %v623 = vadd.f32 %v620, 1.0
    %v624 = vadd.f32 %v622, 1.0
    %v625 = vrcp.pop %v623
    %v626 = vmul.f32 1.0, %v625
    %v627 = vrcp.pop %v624
    %v628 = vmul.f32 1.0, %v627
    %v629 = vmul.f32 %v626, %v613
    %v630 = vmul.f32 %v628, %v614
    %v631 = vsub.f32 1.0, %v626
    %v632 = vsub.f32 1.0, %v628
    %v633 = vmul.f32 %v631, %v77
    %v634 = vmul.f32 %v632, %v78
    %v635 = vadd.f32 %v629, %v633
    %v636 = vadd.f32 %v630, %v634
    %637 = vst [vmem:[#allocation10] sm:$0xff] %v635
    %638 = vst [vmem:[#allocation10 + $0x8] sm:$0xff] %v636
    // Predicated region
    $region38: #{tpu_custom_call.1} parent=1 // pred_check
      _
    $region39: #{tpu_custom_call.1} parent=1 // pred_check_branch
      %640 = sbr.rel (0) target = $region41
    $region40: #{tpu_custom_call.1} parent=1 // pred_region
      %s642 = ssub.s32 256, 256
      %643 = vsyncadd [#allocation4], %s642
      %s644 = sshll.u32 [#allocation10], 4
      %s645 = int_to_ptr.vmem [resolvable:$true] %s644
      %650 = dma.vmem_to_hbm [thread:$0]  %s645, 256, %s5, [#allocation4], 128, 128, 8
    $region41: #{tpu_custom_call.1} parent=1 // pred_fallthru
      _
    // Predicated region
    $region42: #{tpu_custom_call.1} parent=1 // pred_check
      _
    $region43: #{tpu_custom_call.1} parent=1 // pred_check_branch
      %652 = sbr.rel (0) target = $region45
    $region44: #{tpu_custom_call.1} parent=1 // pred_region
      %653 = dma.done [#allocation4], 256
    $region45: #{tpu_custom_call.1} parent=1 // pred_fallthru
      _
    %654 = vsyncpa [#allocation3], 1
    %655 = vsyncpa [#allocation6], 1
    %656 = vsyncpa [#allocation9], 1
    %657 = vsyncpa [#allocation4], 1

</llo_original>
